<compile_context>
chip_gen: v7x
topology: tpu7x:2x2x1
jax: 0.10.0
libtpu: 0.0.40
codegen_flags: <defaults>
</compile_context>

<pallas_src>
import jax
import jax.numpy as jnp
from jax.experimental import pallas as pl
from jax.experimental.pallas import tpu as pltpu


LANE = 128      # lane width / MXU-friendly tile edge
SUBLANE = 8


def _round_up(x, m):
    return ((x + m - 1) // m) * m


def _pad2d(x, rows, cols):
    return jnp.pad(x, ((0, rows - x.shape[0]), (0, cols - x.shape[1])))


# ---------------------------------------------------------------------------
# Kernel 1: one GINConv layer.
#   grid = (node row tiles i [parallel], neighbor K tiles k [arbitrary, last]).
#   acc(TM, H) f32 scratch accumulates A_hat[i,k] @ h[k]; at the last K step the
#   MLP (Linear-ReLU-Linear-ReLU) epilogue runs once per row tile and the bf16
#   result is stored lane-dense.
# ---------------------------------------------------------------------------
def gin_conv_kernel(a_ref, h_ref, w1_ref, b1_ref, w2_ref, b2_ref, o_ref, acc_ref):
    k = pl.program_id(1)

    @pl.when(k == 0)
    def _():
        acc_ref[...] = jnp.zeros_like(acc_ref)

    # bf16 x bf16 -> f32 accumulation on the MXU.
    acc_ref[...] += jnp.dot(a_ref[...], h_ref[...],
                            preferred_element_type=jnp.float32)

    @pl.when(k == pl.num_programs(1) - 1)
    def _():
        agg = acc_ref[...].astype(jnp.bfloat16)
        z = jnp.dot(agg, w1_ref[...], preferred_element_type=jnp.float32) + b1_ref[...]
        z = jnp.maximum(z, 0.0)
        z = jnp.dot(z.astype(jnp.bfloat16), w2_ref[...],
                    preferred_element_type=jnp.float32) + b2_ref[...]
        z = jnp.maximum(z, 0.0)
        o_ref[...] = z.astype(o_ref.dtype)


def gin_conv_layer(a_pad, h_pad, w1, b1, w2, b2, *, tile_n=LANE):
    n_pad = a_pad.shape[0]
    h_in = w1.shape[0]
    h_mid = w1.shape[1]
    h_out = w2.shape[1]
    grid = (n_pad // tile_n, n_pad // tile_n)

    flops = (2 * n_pad * n_pad * h_in
             + 2 * n_pad * h_in * h_mid
             + 2 * n_pad * h_mid * h_out)
    bytes_accessed = ((a_pad.size + h_pad.size + w1.size + w2.size) * 2
                      + (b1.size + b2.size) * 4
                      + n_pad * h_out * 2)

    return pl.pallas_call(
        gin_conv_kernel,
        out_shape=jax.ShapeDtypeStruct((n_pad, h_out), jnp.bfloat16),
        grid=grid,
        in_specs=[
            pl.BlockSpec((tile_n, tile_n), lambda i, k: (i, k)),   # A_hat tile
            pl.BlockSpec((tile_n, h_in), lambda i, k: (k, 0)),     # h tile (K rows)
            pl.BlockSpec((h_in, h_mid), lambda i, k: (0, 0)),      # W1 (resident)
            pl.BlockSpec((1, h_mid), lambda i, k: (0, 0)),         # b1
            pl.BlockSpec((h_mid, h_out), lambda i, k: (0, 0)),     # W2
            pl.BlockSpec((1, h_out), lambda i, k: (0, 0)),         # b2
        ],
        out_specs=pl.BlockSpec((tile_n, h_out), lambda i, k: (i, 0)),
        scratch_shapes=[pltpu.VMEM((tile_n, h_out), jnp.float32)],
        compiler_params=pltpu.CompilerParams(
            dimension_semantics=("parallel", "arbitrary")),
        cost_estimate=pl.CostEstimate(flops=flops, transcendentals=0,
                                      bytes_accessed=bytes_accessed),
    )(a_pad, h_pad, w1, b1, w2, b2)


# ---------------------------------------------------------------------------
# Kernel 2: global mean pool + ffn epilogue.
#   grid = (node K tiles,) reduction; pooled accumulator in f32 scratch; the two
#   tiny ffn matmuls run once at the last K step.
# ---------------------------------------------------------------------------
def gin_readout_kernel(p_ref, h_ref, wf1_ref, bf1_ref, wf2_ref, bf2_ref,
                       o_ref, acc_ref):
    k = pl.program_id(0)

    @pl.when(k == 0)
    def _():
        acc_ref[...] = jnp.zeros_like(acc_ref)

    acc_ref[...] += jnp.dot(p_ref[...], h_ref[...],
                            preferred_element_type=jnp.float32)

    @pl.when(k == pl.num_programs(0) - 1)
    def _():
        f = jnp.dot(acc_ref[...].astype(jnp.bfloat16), wf1_ref[...],
                    preferred_element_type=jnp.float32) + bf1_ref[...]
        f = jnp.maximum(f, 0.0)
        # nn.Dropout is identity in eval mode.
        o_ref[...] = jnp.dot(f.astype(jnp.bfloat16), wf2_ref[...],
                             preferred_element_type=jnp.float32) + bf2_ref[...]


def gin_readout_ffn(p_pad, h_pad, wf1, bf1, wf2, bf2, *, tile_n=LANE):
    g_pad, n_pad = p_pad.shape
    h_dim = wf1.shape[0]
    h_mid = wf1.shape[1]
    c_pad = wf2.shape[1]
    grid = (n_pad // tile_n,)

    flops = (2 * g_pad * n_pad * h_dim
             + 2 * g_pad * h_dim * h_mid
             + 2 * g_pad * h_mid * c_pad)
    bytes_accessed = ((p_pad.size + h_pad.size + wf1.size + wf2.size) * 2
                      + (bf1.size + bf2.size + g_pad * c_pad) * 4)

    return pl.pallas_call(
        gin_readout_kernel,
        out_shape=jax.ShapeDtypeStruct((g_pad, c_pad), jnp.float32),
        grid=grid,
        in_specs=[
            pl.BlockSpec((g_pad, tile_n), lambda k: (0, k)),   # P tile
            pl.BlockSpec((tile_n, h_dim), lambda k: (k, 0)),   # h tile
            pl.BlockSpec((h_dim, h_mid), lambda k: (0, 0)),    # Wf1
            pl.BlockSpec((1, h_mid), lambda k: (0, 0)),        # bf1
            pl.BlockSpec((h_mid, c_pad), lambda k: (0, 0)),    # Wf2
            pl.BlockSpec((1, c_pad), lambda k: (0, 0)),        # bf2
        ],
        out_specs=pl.BlockSpec((g_pad, c_pad), lambda k: (0, 0)),
        scratch_shapes=[pltpu.VMEM((g_pad, h_dim), jnp.float32)],
        compiler_params=pltpu.CompilerParams(
            dimension_semantics=("arbitrary",)),
        cost_estimate=pl.CostEstimate(flops=flops, transcendentals=0,
                                      bytes_accessed=bytes_accessed),
    )(p_pad, h_pad, wf1, bf1, wf2, bf2)


# ---------------------------------------------------------------------------
# Wrapper: pad to lane-dense layouts, cast MXU operands to bf16, run kernels.
# ---------------------------------------------------------------------------
def gin_forward_pallas(a_hat, pool_mat, x, conv_params, ffn_params, num_classes,
                       *, tile_n=LANE):
    n = a_hat.shape[0]
    g = pool_mat.shape[0]
    n_pad = _round_up(n, tile_n)
    g_pad = _round_up(g, SUBLANE)

    # Zero-padding is exact: padded A_hat columns / P columns are zero, so padded
    # node rows never influence real rows or the pooled output; padded feature
    # columns stay zero because weight pads and bias pads are zero.
    a_pad = _pad2d(a_hat, n_pad, n_pad).astype(jnp.bfloat16)
    p_pad = _pad2d(pool_mat, g_pad, n_pad).astype(jnp.bfloat16)

    d_pad = _round_up(x.shape[1], LANE)
    h = _pad2d(x, n_pad, d_pad).astype(jnp.bfloat16)

    for (w1, b1, w2, b2) in conv_params:
        in_p = _round_up(w1.shape[0], LANE)
        mid_p = _round_up(w1.shape[1], LANE)
        out_p = _round_up(w2.shape[1], LANE)
        w1_p = _pad2d(w1, in_p, mid_p).astype(jnp.bfloat16)
        b1_p = _pad2d(b1, 1, mid_p)
        w2_p = _pad2d(w2, mid_p, out_p).astype(jnp.bfloat16)
        b2_p = _pad2d(b2, 1, out_p)
        h = gin_conv_layer(a_pad, h, w1_p, b1_p, w2_p, b2_p, tile_n=tile_n)

    wf1, bf1, wf2, bf2 = ffn_params
    hid_p = _round_up(wf1.shape[0], LANE)
    mid_p = _round_up(wf1.shape[1], LANE)
    c_pad = _round_up(num_classes, LANE)
    wf1_p = _pad2d(wf1, hid_p, mid_p).astype(jnp.bfloat16)
    bf1_p = _pad2d(bf1, 1, mid_p)
    wf2_p = _pad2d(wf2, mid_p, c_pad).astype(jnp.bfloat16)
    bf2_p = _pad2d(bf2, 1, c_pad)

    out_pad = gin_readout_ffn(p_pad, h, wf1_p, bf1_p, wf2_p, bf2_p, tile_n=tile_n)
    return out_pad[:g, :num_classes]


# ---------------------------------------------------------------------------
# Plain-JAX glue: graph -> dense operators, parameter init, references.
# ---------------------------------------------------------------------------
def build_a_hat(edge_index, num_nodes, eps=0.0):
    """Dense GIN aggregation operator: scatter-add adjacency, self-loops removed
    then re-added with weight (1+eps) — matching GINConv.forward."""
    src, dst = edge_index[0], edge_index[1]
    a = jnp.zeros((num_nodes, num_nodes), jnp.float32)
    a = a.at[dst, src].add(1.0)                 # out[i] += x[src] for each edge src->i
    eye = jnp.eye(num_nodes, dtype=jnp.float32)
    a = a * (1.0 - eye)                         # remove_self_loops
    a = a + (1.0 + eps) * eye                   # add_self_loops with weight 1+eps
    return a


def build_pool_matrix(batch, num_graphs):
    """global_mean_pool as a matrix: P[g, i] = 1/|graph g| if batch[i]==g."""
    one_hot = (batch[None, :] == jnp.arange(num_graphs)[:, None]).astype(jnp.float32)
    counts = jnp.maximum(one_hot.sum(axis=1, keepdims=True), 1.0)
    return one_hot / counts


def init_linear(key, fan_in, fan_out):
    kw, kb = jax.random.split(key)
    bound = 1.0 / jnp.sqrt(fan_in)
    w = jax.random.uniform(kw, (fan_in, fan_out), jnp.float32, -bound, bound)
    b = jax.random.uniform(kb, (1, fan_out), jnp.float32, -bound, bound)
    return w, b


def init_params(key, dim_node, dim_hidden, num_classes, num_layer):
    keys = jax.random.split(key, 2 * num_layer + 2)
    conv_params = []
    in_dim = dim_node
    k = 0
    for _ in range(num_layer):
        w1, b1 = init_linear(keys[k], in_dim, dim_hidden); k += 1
        w2, b2 = init_linear(keys[k], dim_hidden, dim_hidden); k += 1
        conv_params.append((w1, b1, w2, b2))
        in_dim = dim_hidden
    wf1, bf1 = init_linear(keys[k], dim_hidden, dim_hidden); k += 1
    wf2, bf2 = init_linear(keys[k], dim_hidden, num_classes)
    return conv_params, (wf1, bf1, wf2, bf2)


def gin_forward_reference_f32(a_hat, pool_mat, x, conv_params, ffn_params):
    """Pure f32 reference (PyTorch eval-mode semantics)."""
    h = x.astype(jnp.float32)
    for (w1, b1, w2, b2) in conv_params:
        agg = a_hat @ h
        h = jnp.maximum(agg @ w1 + b1, 0.0)
        h = jnp.maximum(h @ w2 + b2, 0.0)
    pooled = pool_mat @ h
    wf1, bf1, wf2, bf2 = ffn_params
    f = jnp.maximum(pooled @ wf1 + bf1, 0.0)
    return f @ wf2 + bf2


def gin_forward_reference_mixed(a_hat, pool_mat, x, conv_params, ffn_params):
    """Reference that mirrors the kernel's precision: bf16 MXU operands with f32
    accumulation, bf16 hand-off between layers."""
    def bdot(a, b):
        return jnp.dot(a.astype(jnp.bfloat16), b.astype(jnp.bfloat16),
                       preferred_element_type=jnp.float32)
    h = x.astype(jnp.bfloat16)
    for (w1, b1, w2, b2) in conv_params:
        agg = bdot(a_hat, h)
        z = jnp.maximum(bdot(agg, w1) + b1, 0.0)
        z = jnp.maximum(bdot(z, w2) + b2, 0.0)
        h = z.astype(jnp.bfloat16)
    pooled = bdot(pool_mat, h)
    wf1, bf1, wf2, bf2 = ffn_params
    f = jnp.maximum(bdot(pooled, wf1) + bf1, 0.0)
    return bdot(f, wf2) + bf2


if __name__ == "__main__":
    # Small but non-trivial shapes: 2 graphs x 80 nodes -> N=160 pads to 256,
    # exercising a 2x2 (row, K) grid and the K-reduction accumulator path.
    NUM_GRAPHS = 2
    NODES_PER_GRAPH = 80
    N = NUM_GRAPHS * NODES_PER_GRAPH
    dim_node = 8
    dim_hidden = 32
    num_classes = 4
    num_layer = 3     # conv1 + 2 extra GINConv layers

    key = jax.random.PRNGKey(0)
    k_x, k_param = jax.random.split(key)

    # Node features.
    x = jax.random.normal(k_x, (N, dim_node), jnp.float32)

    # Deterministic edge list: ring within each graph + one chord.
    src_list, dst_list = [], []
    for g in range(NUM_GRAPHS):
        base = g * NODES_PER_GRAPH
        for i in range(NODES_PER_GRAPH):
            s, d = base + i, base + (i + 1) % NODES_PER_GRAPH
            src_list += [s, d]
            dst_list += [d, s]
        src_list += [base, base + NODES_PER_GRAPH // 2]
        dst_list += [base + NODES_PER_GRAPH // 2, base]
    edge_index = jnp.array([src_list, dst_list], dtype=jnp.int32)

    # Batch assignment.
    batch = jnp.repeat(jnp.arange(NUM_GRAPHS, dtype=jnp.int32), NODES_PER_GRAPH)

    a_hat = build_a_hat(edge_index, N, eps=0.0)
    pool_mat = build_pool_matrix(batch, NUM_GRAPHS)
    conv_params, ffn_params = init_params(
        k_param, dim_node, dim_hidden, num_classes, num_layer)

    out = gin_forward_pallas(a_hat, pool_mat, x, conv_params, ffn_params, num_classes)
    out = jax.block_until_ready(out)

    ref_mixed = gin_forward_reference_mixed(a_hat, pool_mat, x, conv_params, ffn_params)
    ref_f32 = gin_forward_reference_f32(a_hat, pool_mat, x, conv_params, ffn_params)

    assert out.shape == (NUM_GRAPHS, num_classes)
    assert jnp.allclose(out, ref_mixed, atol=1e-2, rtol=1e-2), \
        "Pallas kernel mismatch vs mixed-precision (bf16-MXU) reference"
    assert jnp.allclose(out, ref_f32, atol=1e-1, rtol=1e-1), \
        "Pallas kernel mismatch vs f32 reference"

    print("KERNEL_OK")
</pallas_src>

<mosaic_0001>
module attributes {stable_mosaic.version = 11 : i64} {
  func.func @gin_conv_kernel(%arg0: i32, %arg1: i32, %arg2: memref<128x128xbf16, #tpu.memory_space<vmem>>, %arg3: memref<128x128xbf16, #tpu.memory_space<vmem>>, %arg4: memref<128x128xbf16, #tpu.memory_space<vmem>>, %arg5: memref<1x128xf32, #tpu.memory_space<vmem>>, %arg6: memref<128x128xbf16, #tpu.memory_space<vmem>>, %arg7: memref<1x128xf32, #tpu.memory_space<vmem>>, %arg8: memref<128x128xbf16, #tpu.memory_space<vmem>>, %arg9: memref<128x128xf32, #tpu.memory_space<vmem>>) attributes {dimension_semantics = [#tpu.dimension_semantics<parallel>, #tpu.dimension_semantics<arbitrary>], iteration_bounds = array<i64: 2, 2>, scalar_prefetch = 0 : i64, scratch_operands = 1 : i64, tpu.core_type = #tpu.core_type<tc>, window_params = [{transform_indices = @transform_0, window_bounds = array<i64: 128, 128>}, {transform_indices = @transform_1, window_bounds = array<i64: 128, 128>}, {pipeline_mode = #tpu.pipeline_mode<synchronous>, transform_indices = @transform_2, window_bounds = array<i64: 128, 128>}, {pipeline_mode = #tpu.pipeline_mode<synchronous>, transform_indices = @transform_3, window_bounds = array<i64: 1, 128>}, {pipeline_mode = #tpu.pipeline_mode<synchronous>, transform_indices = @transform_4, window_bounds = array<i64: 128, 128>}, {pipeline_mode = #tpu.pipeline_mode<synchronous>, transform_indices = @transform_5, window_bounds = array<i64: 1, 128>}, {transform_indices = @transform_6, window_bounds = array<i64: 128, 128>}]} {
    %c0_i32 = arith.constant 0 : i32
    %0 = arith.cmpi eq, %arg1, %c0_i32 : i32
    %1 = arith.extui %0 : i1 to i32
    %c0_i32_0 = arith.constant 0 : i32
    %2 = arith.cmpi ne, %1, %c0_i32_0 : i32
    scf.if %2 {
      %cst_9 = arith.constant 0.000000e+00 : f32
      %12 = vector.broadcast %cst_9 : f32 to vector<128x128xf32>
      %c0_10 = arith.constant 0 : index
      %c0_11 = arith.constant 0 : index
      %13 = vector.load %arg9[%c0_10, %c0_11] : memref<128x128xf32, #tpu.memory_space<vmem>>, vector<128x128xf32>
      tpu.vector_store %arg9[%c0_10, %c0_11], %12 {strides = array<i32>} : memref<128x128xf32, #tpu.memory_space<vmem>>, vector<128x128xf32>,
    } else {
    }
    %c0 = arith.constant 0 : index
    %c0_1 = arith.constant 0 : index
    %3 = vector.load %arg9[%c0, %c0_1] : memref<128x128xf32, #tpu.memory_space<vmem>>, vector<128x128xf32>
    %c0_2 = arith.constant 0 : index
    %c0_3 = arith.constant 0 : index
    %4 = vector.load %arg2[%c0_2, %c0_3] : memref<128x128xbf16, #tpu.memory_space<vmem>>, vector<128x128xbf16>
    %c0_4 = arith.constant 0 : index
    %c0_5 = arith.constant 0 : index
    %5 = vector.load %arg3[%c0_4, %c0_5] : memref<128x128xbf16, #tpu.memory_space<vmem>>, vector<128x128xbf16>
    %cst = arith.constant dense<0.000000e+00> : vector<128x128xf32>
    %6 = tpu.matmul %4, %5, %cst {dimension_numbers = #tpu.dot_dimension_numbers<[1], [0], [0], [1], [0, 0, 1, 1], [], []>} : vector<128x128xbf16>, vector<128x128xbf16>, vector<128x128xf32> -> vector<128x128xf32>
    %7 = arith.addf %3, %6 : vector<128x128xf32>
    %c0_6 = arith.constant 0 : index
    %c0_7 = arith.constant 0 : index
    %8 = vector.load %arg9[%c0_6, %c0_7] : memref<128x128xf32, #tpu.memory_space<vmem>>, vector<128x128xf32>
    tpu.vector_store %arg9[%c0_6, %c0_7], %7 {strides = array<i32>} : memref<128x128xf32, #tpu.memory_space<vmem>>, vector<128x128xf32>,
    %c1_i32 = arith.constant 1 : i32
    %9 = arith.cmpi eq, %arg1, %c1_i32 : i32
    %10 = arith.extui %9 : i1 to i32
    %c0_i32_8 = arith.constant 0 : i32
    %11 = arith.cmpi ne, %10, %c0_i32_8 : i32
    scf.if %11 {
      %c0_9 = arith.constant 0 : index
      %c0_10 = arith.constant 0 : index
      %12 = vector.load %arg9[%c0_9, %c0_10] : memref<128x128xf32, #tpu.memory_space<vmem>>, vector<128x128xf32>
      %13 = arith.truncf %12 : vector<128x128xf32> to vector<128x128xbf16>
      %c0_11 = arith.constant 0 : index
      %c0_12 = arith.constant 0 : index
      %14 = vector.load %arg4[%c0_11, %c0_12] : memref<128x128xbf16, #tpu.memory_space<vmem>>, vector<128x128xbf16>
      %cst_13 = arith.constant dense<0.000000e+00> : vector<128x128xf32>
      %15 = tpu.matmul %13, %14, %cst_13 {dimension_numbers = #tpu.dot_dimension_numbers<[1], [0], [0], [1], [0, 0, 1, 1], [], []>} : vector<128x128xbf16>, vector<128x128xbf16>, vector<128x128xf32> -> vector<128x128xf32>
      %c0_14 = arith.constant 0 : index
      %c0_15 = arith.constant 0 : index
      %16 = vector.load %arg5[%c0_14, %c0_15] : memref<1x128xf32, #tpu.memory_space<vmem>>, vector<1x128xf32>
      %17 = vector.broadcast %16 : vector<1x128xf32> to vector<128x128xf32>
      %18 = arith.addf %15, %17 : vector<128x128xf32>
      %cst_16 = arith.constant 0.000000e+00 : f32
      %19 = vector.broadcast %cst_16 : f32 to vector<128x128xf32>
      %20 = arith.maximumf %18, %19 : vector<128x128xf32>
      %21 = arith.truncf %20 : vector<128x128xf32> to vector<128x128xbf16>
      %c0_17 = arith.constant 0 : index
      %c0_18 = arith.constant 0 : index
      %22 = vector.load %arg6[%c0_17, %c0_18] : memref<128x128xbf16, #tpu.memory_space<vmem>>, vector<128x128xbf16>
      %cst_19 = arith.constant dense<0.000000e+00> : vector<128x128xf32>
      %23 = tpu.matmul %21, %22, %cst_19 {dimension_numbers = #tpu.dot_dimension_numbers<[1], [0], [0], [1], [0, 0, 1, 1], [], []>} : vector<128x128xbf16>, vector<128x128xbf16>, vector<128x128xf32> -> vector<128x128xf32>
      %c0_20 = arith.constant 0 : index
      %c0_21 = arith.constant 0 : index
      %24 = vector.load %arg7[%c0_20, %c0_21] : memref<1x128xf32, #tpu.memory_space<vmem>>, vector<1x128xf32>
      %25 = vector.broadcast %24 : vector<1x128xf32> to vector<128x128xf32>
      %26 = arith.addf %23, %25 : vector<128x128xf32>
      %cst_22 = arith.constant 0.000000e+00 : f32
      %27 = vector.broadcast %cst_22 : f32 to vector<128x128xf32>
      %28 = arith.maximumf %26, %27 : vector<128x128xf32>
      %29 = arith.truncf %28 : vector<128x128xf32> to vector<128x128xbf16>
      %c0_23 = arith.constant 0 : index
      %c0_24 = arith.constant 0 : index
      %30 = vector.load %arg8[%c0_23, %c0_24] : memref<128x128xbf16, #tpu.memory_space<vmem>>, vector<128x128xbf16>
      tpu.vector_store %arg8[%c0_23, %c0_24], %29 {strides = array<i32>} : memref<128x128xbf16, #tpu.memory_space<vmem>>, vector<128x128xbf16>,
    } else {
    }
    return
  }
  func.func @transform_0(%arg0: i32, %arg1: i32) -> (i32, i32) {
    %c0_i32 = arith.constant 0 : i32
    return %arg0, %arg1 : i32, i32
  }
  func.func @transform_1(%arg0: i32, %arg1: i32) -> (i32, i32) {
    %c0_i32 = arith.constant 0 : i32
    %c0_i32_0 = arith.constant 0 : i32
    return %arg1, %c0_i32 : i32, i32
  }
  func.func @transform_2(%arg0: i32, %arg1: i32) -> (i32, i32) {
    %c0_i32 = arith.constant 0 : i32
    %c0_i32_0 = arith.constant 0 : i32
    %c0_i32_1 = arith.constant 0 : i32
    return %c0_i32, %c0_i32_0 : i32, i32
  }
  func.func @transform_3(%arg0: i32, %arg1: i32) -> (i32, i32) {
    %c0_i32 = arith.constant 0 : i32
    %c0_i32_0 = arith.constant 0 : i32
    %c0_i32_1 = arith.constant 0 : i32
    return %c0_i32, %c0_i32_0 : i32, i32
  }
  func.func @transform_4(%arg0: i32, %arg1: i32) -> (i32, i32) {
    %c0_i32 = arith.constant 0 : i32
    %c0_i32_0 = arith.constant 0 : i32
    %c0_i32_1 = arith.constant 0 : i32
    return %c0_i32, %c0_i32_0 : i32, i32
  }
  func.func @transform_5(%arg0: i32, %arg1: i32) -> (i32, i32) {
    %c0_i32 = arith.constant 0 : i32
    %c0_i32_0 = arith.constant 0 : i32
    %c0_i32_1 = arith.constant 0 : i32
    return %c0_i32, %c0_i32_0 : i32, i32
  }
  func.func @transform_6(%arg0: i32, %arg1: i32) -> (i32, i32) {
    %c0_i32 = arith.constant 0 : i32
    %c0_i32_0 = arith.constant 0 : i32
    return %arg0, %c0_i32 : i32, i32
  }
}

</mosaic_0001>

<llo_original>
// kernel: tpu_custom_call.1
$region0: #{tpu_custom_call.1}
  #allocation0 [shape = 'u32[]', space=smem, size = 0x4, offset = 0x4, fixed_abs, tag = 'smem constant byte address 0x4 - core index']
  #allocation1 [shape = 'u32[144,128]{1,0:T(1,128)}', space=vmem, size = 0x12000, scoped, tag = 'internal scratch']
  #allocation2 [shape = 'f32[128,128]{1,0:T(8,128)}', space=vmem, size = 0x10000, scoped, tag = 'scratch operand']
  %s0 = inlined_call_operand.hbm [shape: bf16[256,256], index: 0, kind: input, shape index: {}]
  %s1 = inlined_call_operand.hbm [shape: bf16[256,128], index: 1, kind: input, shape index: {}]
  %s2 = inlined_call_operand.hbm [shape: bf16[128,128], index: 2, kind: input, shape index: {}]
  %s3 = inlined_call_operand.vmem [shape: f32[1,128], index: 3, kind: input, shape index: {}]
  %s4 = inlined_call_operand.hbm [shape: bf16[128,128], index: 4, kind: input, shape index: {}]
  %s5 = inlined_call_operand.vmem [shape: f32[1,128], index: 5, kind: input, shape index: {}]
  %s6 = inlined_call_operand.hbm [shape: bf16[256,128], index: 6, kind: output, shape index: {}]
  %s7 = sld [smem:[#allocation0]]
  $region81: #{tpu_custom_call.1} parent=0
    _
  %s9 = ssub.s32 1, %s7
  %s10 = scalar_select 0, %s9, %s7
  $region1: #{tpu_custom_call.1} parent=0
    #allocation3 [shape = 'u8[65536]{0}', space=vmem, size = 0x10000, scoped, tag = 'input window, operand 0']
    #allocation4 [shape = 's32[2]{0}', space=sflag, size = 0x8, scoped, tag = 'scoped memory for tpu_custom_call.1']
    #allocation5 [shape = 's32[2]{0}', space=sflag, size = 0x8, scoped, tag = 'scoped memory for tpu_custom_call.1']
    #allocation6 [shape = 'u8[65536]{0}', space=vmem, size = 0x10000, scoped, tag = 'input window, operand 1']
    #allocation7 [shape = 's32[2]{0}', space=sflag, size = 0x8, scoped, tag = 'scoped memory for tpu_custom_call.1']
    #allocation8 [shape = 'u8[32768]{0}', space=vmem, size = 0x8000, scoped, tag = 'input window, operand 2, single buffered']
    #allocation9 [shape = 'u8[32768]{0}', space=vmem, size = 0x8000, scoped, tag = 'input window, operand 4, single buffered']
    #allocation10 [shape = 's32[1]{0}', space=sflag, size = 0x4, scoped, tag = 'scoped memory for tpu_custom_call.1']
    #allocation11 [shape = 'u8[65536]{0}', space=vmem, size = 0x10000, scoped, tag = 'output window, operand 0']
    %11 = vsyncpa [#allocation4], 0
    %s12 = scalar_lea.sflag [#allocation4], 1
    %13 = vsyncpa %s12, 0
    %14 = vsyncpa [#allocation7], 0
    %s15 = scalar_lea.sflag [#allocation7], 1
    %16 = vsyncpa %s15, 0
    %17 = vsyncpa [#allocation10], 0
    %18 = vsyncpa [#allocation5], 0
    %s19 = scalar_lea.sflag [#allocation5], 1
    %20 = vsyncpa %s19, 0
    loop: start=0, step=1, limit=6
    $region2: #{tpu_custom_call.1} parent=1 // loop_pre_header
      _
    $region3: #{tpu_custom_call.1} parent=1 // loop_header
      %s22 = sphi 0, %s26
      %p23 = scmp.ge.s32.totalorder %s22, 6
      %s29 = sphi 0, %s41
      %s30 = sphi 0, %s37
      %s31 = sphi 0, %s29
      %s32 = sphi 0, %s30
      %s33 = sphi 0, %s31
      %s34 = sphi 0, %s32
      %s46 = sphi 0, %s48
      %s49 = sphi 0, %s46
      %s50 = sphi 0, %s49
      %s66 = sphi 0, %s50
      %s72 = sphi 0, %s74
      %s75 = sphi 0, %s72
      %s76 = sphi 0, %s75
      %s92 = sphi 0, %s76
      %s96 = sphi 0, %s96
      %s98 = sphi 0, %s96
      %s99 = sphi 0, %s98
      %s113 = sphi 0, %s99
      %s117 = sphi 0, %s117
      %s119 = sphi 0, %s117
      %s120 = sphi 0, %s119
      %s134 = sphi 0, %s120
      %s138 = sphi 0, %s138
      %s140 = sphi 0, %s138
      %s141 = sphi 0, %s140
      %s155 = sphi 0, %s141
      %s159 = sphi 0, %s159
      %s161 = sphi 0, %s159
      %s162 = sphi 0, %s161
      %s176 = sphi 0, %s162
      %s182 = sphi 0, %s184
      %s185 = sphi 0, %s182
      %s186 = sphi 0, %s185
      %s202 = sphi 0, %s186
    $region4: #{tpu_custom_call.1} parent=1 // loop_header_branch
      %25 = sbr.rel (%p23) target = $region8
    $region5: #{tpu_custom_call.1} parent=1 // loop_body
      %s27 = ssub.s32 %s22, 1
      %s28 = ssub.s32 %s22, 2
      %s35 = sadd.s32 1, %s30
      %p36 = scmp.ge.s32.totalorder %s35, 2
      %s37 = scalar_select %p36, 0, %s35
      %s38 = sadd.s32 1, %s29
      %s39 = scalar_select %p36, %s38, %s29
      %p40 = scmp.ge.s32.totalorder %s39, 2
      %s41 = scalar_select %p40, 0, %s39
      %s42 = ssub.s32 %s29, %s41
      %s43 = ssub.s32 %s30, %s37
      %s44 = sor.u32 %s42, %s43
      %p45 = scmp.eq.s32.totalorder %s44, 0
      %s47 = sadd.s32 %s46, 1
      %s48 = scalar_select %p45, %s46, %s47
      %p51 = pneg %p45
      %p52 = scmp.eq.s32.totalorder %s22, 3
      %p53 = por %p51, %p52
      %p54 = scmp.ne.s32.totalorder %s46, %s49
      %p55 = scmp.eq.s32.totalorder %s22, 0
      %p56 = por %p54, %p55
      %p57 = scmp.ne.s32.totalorder %s46, %s49
      %p58 = scmp.eq.s32.totalorder %s27, 3
      %p59 = por %p57, %p58
      %p60 = scmp.ne.s32.totalorder %s49, %s50
      %p61 = scmp.eq.s32.totalorder %s27, 0
      %p62 = por %p60, %p61
      %p63 = scmp.ne.s32.totalorder %s49, %s50
      %p64 = scmp.eq.s32.totalorder %s28, 3
      %p65 = por %p63, %p64
      %p67 = scmp.ne.s32.totalorder %s50, %s66
      %p68 = scmp.eq.s32.totalorder %s28, 0
      %p69 = por %p67, %p68
      %s70 = ssub.s32 %s30, %s37
      %p71 = scmp.eq.s32.totalorder %s70, 0
      %s73 = sadd.s32 %s72, 1
      %s74 = scalar_select %p71, %s72, %s73
      %p77 = pneg %p71
      %p78 = scmp.eq.s32.totalorder %s22, 3
      %p79 = por %p77, %p78
      %p80 = scmp.ne.s32.totalorder %s72, %s75
      %p81 = scmp.eq.s32.totalorder %s22, 0
      %p82 = por %p80, %p81
      %p83 = scmp.ne.s32.totalorder %s72, %s75
      %p84 = scmp.eq.s32.totalorder %s27, 3
      %p85 = por %p83, %p84
      %p86 = scmp.ne.s32.totalorder %s75, %s76
      %p87 = scmp.eq.s32.totalorder %s27, 0
      %p88 = por %p86, %p87
      %p89 = scmp.ne.s32.totalorder %s75, %s76
      %p90 = scmp.eq.s32.totalorder %s28, 3
      %p91 = por %p89, %p90
      %p93 = scmp.ne.s32.totalorder %s76, %s92
      %p94 = scmp.eq.s32.totalorder %s28, 0
      %p95 = por %p93, %p94
      %s97 = sadd.s32 %s96, 1
      %p100 = scmp.eq.s32.totalorder %s22, 3
      %p101 = scmp.ne.s32.totalorder %s96, %s98
      %p102 = scmp.eq.s32.totalorder %s22, 0
      %p103 = por %p101, %p102
      %p104 = scmp.ne.s32.totalorder %s96, %s98
      %p105 = scmp.eq.s32.totalorder %s27, 3
      %p106 = por %p104, %p105
      %p107 = scmp.ne.s32.totalorder %s98, %s99
      %p108 = scmp.eq.s32.totalorder %s27, 0
      %p109 = por %p107, %p108
      %p110 = scmp.ne.s32.totalorder %s98, %s99
      %p111 = scmp.eq.s32.totalorder %s28, 3
      %p112 = por %p110, %p111
      %p114 = scmp.ne.s32.totalorder %s99, %s113
      %p115 = scmp.eq.s32.totalorder %s28, 0
      %p116 = por %p114, %p115
      %s118 = sadd.s32 %s117, 1
      %p121 = scmp.eq.s32.totalorder %s22, 3
      %p122 = scmp.ne.s32.totalorder %s117, %s119
      %p123 = scmp.eq.s32.totalorder %s22, 0
      %p124 = por %p122, %p123
      %p125 = scmp.ne.s32.totalorder %s117, %s119
      %p126 = scmp.eq.s32.totalorder %s27, 3
      %p127 = por %p125, %p126
      %p128 = scmp.ne.s32.totalorder %s119, %s120
      %p129 = scmp.eq.s32.totalorder %s27, 0
      %p130 = por %p128, %p129
      %p131 = scmp.ne.s32.totalorder %s119, %s120
      %p132 = scmp.eq.s32.totalorder %s28, 3
      %p133 = por %p131, %p132
      %p135 = scmp.ne.s32.totalorder %s120, %s134
      %p136 = scmp.eq.s32.totalorder %s28, 0
      %p137 = por %p135, %p136
      %s139 = sadd.s32 %s138, 1
      %p142 = scmp.eq.s32.totalorder %s22, 3
      %p143 = scmp.ne.s32.totalorder %s138, %s140
      %p144 = scmp.eq.s32.totalorder %s22, 0
      %p145 = por %p143, %p144
      %p146 = scmp.ne.s32.totalorder %s138, %s140
      %p147 = scmp.eq.s32.totalorder %s27, 3
      %p148 = por %p146, %p147
      %p149 = scmp.ne.s32.totalorder %s140, %s141
      %p150 = scmp.eq.s32.totalorder %s27, 0
      %p151 = por %p149, %p150
      %p152 = scmp.ne.s32.totalorder %s140, %s141
      %p153 = scmp.eq.s32.totalorder %s28, 3
      %p154 = por %p152, %p153
      %p156 = scmp.ne.s32.totalorder %s141, %s155
      %p157 = scmp.eq.s32.totalorder %s28, 0
      %p158 = por %p156, %p157
      %s160 = sadd.s32 %s159, 1
      %p163 = scmp.eq.s32.totalorder %s22, 3
      %p164 = scmp.ne.s32.totalorder %s159, %s161
      %p165 = scmp.eq.s32.totalorder %s22, 0
      %p166 = por %p164, %p165
      %p167 = scmp.ne.s32.totalorder %s159, %s161
      %p168 = scmp.eq.s32.totalorder %s27, 3
      %p169 = por %p167, %p168
      %p170 = scmp.ne.s32.totalorder %s161, %s162
      %p171 = scmp.eq.s32.totalorder %s27, 0
      %p172 = por %p170, %p171
      %p173 = scmp.ne.s32.totalorder %s161, %s162
      %p174 = scmp.eq.s32.totalorder %s28, 3
      %p175 = por %p173, %p174
      %p177 = scmp.ne.s32.totalorder %s162, %s176
      %p178 = scmp.eq.s32.totalorder %s28, 0
      %p179 = por %p177, %p178
      %s180 = ssub.s32 %s29, %s41
      %p181 = scmp.eq.s32.totalorder %s180, 0
      %s183 = sadd.s32 %s182, 1
      %s184 = scalar_select %p181, %s182, %s183
      %p187 = pneg %p181
      %p188 = scmp.eq.s32.totalorder %s22, 3
      %p189 = por %p187, %p188
      %p190 = scmp.ne.s32.totalorder %s182, %s185
      %p191 = scmp.eq.s32.totalorder %s22, 0
      %p192 = por %p190, %p191
      %p193 = scmp.ne.s32.totalorder %s182, %s185
      %p194 = scmp.eq.s32.totalorder %s27, 3
      %p195 = por %p193, %p194
      %p196 = scmp.ne.s32.totalorder %s185, %s186
      %p197 = scmp.eq.s32.totalorder %s27, 0
      %p198 = por %p196, %p197
      %p199 = scmp.ne.s32.totalorder %s185, %s186
      %p200 = scmp.eq.s32.totalorder %s28, 3
      %p201 = por %p199, %p200
      %p203 = scmp.ne.s32.totalorder %s186, %s202
      %p204 = scmp.eq.s32.totalorder %s28, 0
      %p205 = por %p203, %p204
      %p206 = scmp.le.s32.totalorder 1, %s22
      %p207 = scmp.lt.s32.totalorder %s22, 5
      %p208 = pnand %p206, %p207
      %p209 = pneg %p208
      // Predicated region
      $region9: #{tpu_custom_call.1} parent=5 // pred_check
        _
      $region10: #{tpu_custom_call.1} parent=5 // pred_check_branch
        %211 = sbr.rel (%p208) target = $region12
      $region11: #{tpu_custom_call.1} parent=5 // pred_region
        %s212 = ssub.s32 %s22, 1
        // Predicated region
        $region13: #{tpu_custom_call.1} parent=11 // pred_check
          %p213 = pneg %p109
        $region14: #{tpu_custom_call.1} parent=11 // pred_check_branch
          %215 = sbr.rel (%p213) target = $region16
        $region15: #{tpu_custom_call.1} parent=11 // pred_region
          %s217 = ssub.s32 1024, 1024
          %218 = vsyncadd [#allocation7], %s217
          %s219 = sshll.u32 [#allocation8], 4
          %s220 = int_to_ptr.vmem [resolvable:$true] %s219
          %225 = dma.hbm_to_vmem [thread:$0]  %s2, 1024, %s220, [#allocation7], 64, 64, 4
        $region16: #{tpu_custom_call.1} parent=11 // pred_fallthru
          _
        // Predicated region
        $region17: #{tpu_custom_call.1} parent=11 // pred_check
          %p226 = pneg %p130
        $region18: #{tpu_custom_call.1} parent=11 // pred_check_branch
          %228 = sbr.rel (%p226) target = $region20
        $region19: #{tpu_custom_call.1} parent=11 // pred_region
          _
        $region20: #{tpu_custom_call.1} parent=11 // pred_fallthru
          _
        // Predicated region
        $region21: #{tpu_custom_call.1} parent=11 // pred_check
          %p229 = pneg %p151
        $region22: #{tpu_custom_call.1} parent=11 // pred_check_branch
          %231 = sbr.rel (%p229) target = $region24
        $region23: #{tpu_custom_call.1} parent=11 // pred_region
          %s233 = ssub.s32 1024, 1024
          %234 = vsyncadd [#allocation10], %s233
          %s235 = sshll.u32 [#allocation9], 4
          %s236 = int_to_ptr.vmem [resolvable:$true] %s235
          %241 = dma.hbm_to_vmem [thread:$0]  %s4, 1024, %s236, [#allocation10], 64, 64, 4
        $region24: #{tpu_custom_call.1} parent=11 // pred_fallthru
          _
        // Predicated region
        $region25: #{tpu_custom_call.1} parent=11 // pred_check
          %p242 = pneg %p172
        $region26: #{tpu_custom_call.1} parent=11 // pred_check_branch
          %244 = sbr.rel (%p242) target = $region28
        $region27: #{tpu_custom_call.1} parent=11 // pred_region
          _
        $region28: #{tpu_custom_call.1} parent=11 // pred_fallthru
          _
      $region12: #{tpu_custom_call.1} parent=5 // pred_fallthru
        _
      %p245 = scmp.lt.s32.totalorder %s22, 4
      // Predicated region
      $region29: #{tpu_custom_call.1} parent=5 // pred_check
        %p246 = pneg %p245
      $region30: #{tpu_custom_call.1} parent=5 // pred_check_branch
        %248 = sbr.rel (%p246) target = $region32
      $region31: #{tpu_custom_call.1} parent=5 // pred_region
        // Predicated region
        $region33: #{tpu_custom_call.1} parent=31 // pred_check
          %p249 = pneg %p56
        $region34: #{tpu_custom_call.1} parent=31 // pred_check_branch
          %251 = sbr.rel (%p249) target = $region36
        $region35: #{tpu_custom_call.1} parent=31 // pred_region
          %s252 = sand.u32 %s46, 1
          %s253 = scalar_lea.sflag [#allocation4], %s252
          %s254 = sand.u32 %s46, 1
          %s255 = smul.addr %s254, 64
          %s256 = scalar_lea.vmem [#allocation3], %s255
          %s257 = smul.u32 16, %s29
          %s259 = ssub.s32 1024, 1024
          %260 = vsyncadd %s253, %s259
          %s261 = smul.addr %s257, 2
          %s262 = sadd.s32 %s30, %s261
          %s263 = smul.addr %s262, 64
          %s264 = scalar_lea.hbm %s0, %s263
          %s265 = sshll.u32 %s256, 4
          %s266 = int_to_ptr.vmem [resolvable:$true] %s265
          %271 = dma.hbm_to_vmem [thread:$0]  %s264, 1024, %s266, %s253, 128, 64, 4
        $region36: #{tpu_custom_call.1} parent=31 // pred_fallthru
          _
        // Predicated region
        $region37: #{tpu_custom_call.1} parent=31 // pred_check
          %p272 = pneg %p82
        $region38: #{tpu_custom_call.1} parent=31 // pred_check_branch
          %274 = sbr.rel (%p272) target = $region40
        $region39: #{tpu_custom_call.1} parent=31 // pred_region
          %s275 = sand.u32 %s22, 1
          %s276 = scalar_lea.sflag [#allocation7], %s275
          %s277 = sand.u32 %s72, 1
          %s278 = smul.addr %s277, 64
          %s279 = scalar_lea.vmem [#allocation6], %s278
          %s280 = smul.u32 16, %s30
          %s282 = ssub.s32 1024, 1024
          %283 = vsyncadd %s276, %s282
          %s284 = smul.addr %s280, 64
          %s285 = scalar_lea.hbm %s1, %s284
          %s286 = sshll.u32 %s279, 4
          %s287 = int_to_ptr.vmem [resolvable:$true] %s286
          %292 = dma.hbm_to_vmem [thread:$0]  %s285, 1024, %s287, %s276, 64, 64, 4
        $region40: #{tpu_custom_call.1} parent=31 // pred_fallthru
          _
      $region32: #{tpu_custom_call.1} parent=5 // pred_fallthru
        _
      %p293 = scmp.le.s32.totalorder 1, %s22
      %p294 = scmp.lt.s32.totalorder %s22, 5
      %p295 = pnand %p293, %p294
      %p296 = pneg %p295
      // Predicated region
      $region41: #{tpu_custom_call.1} parent=5 // pred_check
        _
      $region42: #{tpu_custom_call.1} parent=5 // pred_check_branch
        %298 = sbr.rel (%p295) target = $region44
      $region43: #{tpu_custom_call.1} parent=5 // pred_region
        %s299 = ssub.s32 %s22, 1
        %s300 = sand.u32 %s49, 1
        %s301 = scalar_lea.sflag [#allocation4], %s300
        %s302 = sand.u32 %s49, 1
        %s303 = smul.addr %s302, 64
        %s304 = scalar_lea.vmem [#allocation3], %s303
        // Predicated region
        $region45: #{tpu_custom_call.1} parent=43 // pred_check
          %p305 = pneg %p62
        $region46: #{tpu_custom_call.1} parent=43 // pred_check_branch
          %307 = sbr.rel (%p305) target = $region48
        $region47: #{tpu_custom_call.1} parent=43 // pred_region
          %308 = dma.done %s301, 1024
        $region48: #{tpu_custom_call.1} parent=43 // pred_fallthru
          _
        %s309 = sand.u32 %s27, 1
        %s310 = scalar_lea.sflag [#allocation7], %s309
        %s311 = sand.u32 %s75, 1
        %s312 = smul.addr %s311, 64
        %s313 = scalar_lea.vmem [#allocation6], %s312
        // Predicated region
        $region49: #{tpu_custom_call.1} parent=43 // pred_check
          %p314 = pneg %p88
        $region50: #{tpu_custom_call.1} parent=43 // pred_check_branch
          %316 = sbr.rel (%p314) target = $region52
        $region51: #{tpu_custom_call.1} parent=43 // pred_region
          %317 = dma.done %s310, 1024
        $region52: #{tpu_custom_call.1} parent=43 // pred_fallthru
          _
        // Predicated region
        $region53: #{tpu_custom_call.1} parent=43 // pred_check
          %p318 = pneg %p109
        $region54: #{tpu_custom_call.1} parent=43 // pred_check_branch
          %320 = sbr.rel (%p318) target = $region56
        $region55: #{tpu_custom_call.1} parent=43 // pred_region
          %321 = dma.done [#allocation7], 1024
        $region56: #{tpu_custom_call.1} parent=43 // pred_fallthru
          _
        // Predicated region
        $region57: #{tpu_custom_call.1} parent=43 // pred_check
          %p322 = pneg %p151
        $region58: #{tpu_custom_call.1} parent=43 // pred_check_branch
          %324 = sbr.rel (%p322) target = $region60
        $region59: #{tpu_custom_call.1} parent=43 // pred_region
          %325 = dma.done [#allocation10], 1024
        $region60: #{tpu_custom_call.1} parent=43 // pred_fallthru
          _
        %s326 = sand.u32 %s49, 1
        %s327 = scalar_lea.sflag [#allocation4], %s326
        %s328 = sand.u32 %s49, 1
        %s329 = smul.addr %s328, 64
        %s330 = scalar_lea.vmem [#allocation3], %s329
        %p331 = pneg %p62
        %p332 = pneg %p59
        %s333 = sand.u32 %s27, 1
        %s334 = scalar_lea.sflag [#allocation7], %s333
        %s335 = sand.u32 %s75, 1
        %s336 = smul.addr %s335, 64
        %s337 = scalar_lea.vmem [#allocation6], %s336
        %p338 = pneg %p88
        %p339 = pneg %p85
        %p340 = pneg %p109
        %p341 = pneg %p106
        %p342 = pneg %p130
        %p343 = pneg %p127
        %p344 = pneg %p151
        %p345 = pneg %p148
        %p346 = pneg %p172
        %p347 = pneg %p169
        %p348 = pneg %p198
        %p349 = pneg %p195
        %s350 = sand.u32 %s185, 1
        %s351 = scalar_lea.sflag [#allocation5], %s350
        %s352 = sand.u32 %s185, 1
        %s353 = smul.addr %s352, 64
        %s354 = scalar_lea.vmem [#allocation11], %s353
        %s355 = smul.u32 16, %s31
        %s356 = smul.u32 16, %s32
        %s357 = smul.u32 16, %s31
        %p359 = scmp.eq.s32.totalorder %s32, 0
        // Predicated region
        $region61: #{tpu_custom_call.1} parent=43 // pred_check
          %p360 = pneg %p359
        $region62: #{tpu_custom_call.1} parent=43 // pred_check_branch
          %362 = sbr.rel (%p360) target = $region64
        $region63: #{tpu_custom_call.1} parent=43 // pred_region
          %363 = vst [vmem:[#allocation2] sm:$0xff] 0.0
          %364 = vst [vmem:[#allocation2 + $0x8] sm:$0xff] 0.0
          %365 = vst [vmem:[#allocation2 + $0x10] sm:$0xff] 0.0
          %366 = vst [vmem:[#allocation2 + $0x18] sm:$0xff] 0.0
          %367 = vst [vmem:[#allocation2 + $0x20] sm:$0xff] 0.0
          %368 = vst [vmem:[#allocation2 + $0x28] sm:$0xff] 0.0
          %369 = vst [vmem:[#allocation2 + $0x30] sm:$0xff] 0.0
          %370 = vst [vmem:[#allocation2 + $0x38] sm:$0xff] 0.0
          %371 = vst [vmem:[#allocation2 + $0x40] sm:$0xff] 0.0
          %372 = vst [vmem:[#allocation2 + $0x48] sm:$0xff] 0.0
          %373 = vst [vmem:[#allocation2 + $0x50] sm:$0xff] 0.0
          %374 = vst [vmem:[#allocation2 + $0x58] sm:$0xff] 0.0
          %375 = vst [vmem:[#allocation2 + $0x60] sm:$0xff] 0.0
          %376 = vst [vmem:[#allocation2 + $0x68] sm:$0xff] 0.0
          %377 = vst [vmem:[#allocation2 + $0x70] sm:$0xff] 0.0
          %378 = vst [vmem:[#allocation2 + $0x78] sm:$0xff] 0.0
        $region64: #{tpu_custom_call.1} parent=43 // pred_fallthru
          _
        %v379 = vld [vmem:[#allocation2] sm:$0xff]
        %v380 = vld [vmem:[#allocation2 + $0x8] sm:$0xff]
        %v381 = vld [vmem:[#allocation2 + $0x10] sm:$0xff]
        %v382 = vld [vmem:[#allocation2 + $0x18] sm:$0xff]
        %v383 = vld [vmem:[#allocation2 + $0x20] sm:$0xff]
        %v384 = vld [vmem:[#allocation2 + $0x28] sm:$0xff]
        %v385 = vld [vmem:[#allocation2 + $0x30] sm:$0xff]
        %v386 = vld [vmem:[#allocation2 + $0x38] sm:$0xff]
        %v387 = vld [vmem:[#allocation2 + $0x40] sm:$0xff]
        %v388 = vld [vmem:[#allocation2 + $0x48] sm:$0xff]
        %v389 = vld [vmem:[#allocation2 + $0x50] sm:$0xff]
        %v390 = vld [vmem:[#allocation2 + $0x58] sm:$0xff]
        %v391 = vld [vmem:[#allocation2 + $0x60] sm:$0xff]
        %v392 = vld [vmem:[#allocation2 + $0x68] sm:$0xff]
        %v393 = vld [vmem:[#allocation2 + $0x70] sm:$0xff]
        %v394 = vld [vmem:[#allocation2 + $0x78] sm:$0xff]
        %v395 = vld [vmem:[%s304] sm:$0xf]
        %v396 = vld [vmem:[%s304 + $0x4] sm:$0xf]
        %v397 = vld [vmem:[%s304 + $0x8] sm:$0xf]
        %v398 = vld [vmem:[%s304 + $0xc] sm:$0xf]
        %v399 = vld [vmem:[%s304 + $0x10] sm:$0xf]
        %v400 = vld [vmem:[%s304 + $0x14] sm:$0xf]
        %v401 = vld [vmem:[%s304 + $0x18] sm:$0xf]
        %v402 = vld [vmem:[%s304 + $0x1c] sm:$0xf]
        %v403 = vld [vmem:[%s304 + $0x20] sm:$0xf]
        %v404 = vld [vmem:[%s304 + $0x24] sm:$0xf]
        %v405 = vld [vmem:[%s304 + $0x28] sm:$0xf]
        %v406 = vld [vmem:[%s304 + $0x2c] sm:$0xf]
        %v407 = vld [vmem:[%s304 + $0x30] sm:$0xf]
        %v408 = vld [vmem:[%s304 + $0x34] sm:$0xf]
        %v409 = vld [vmem:[%s304 + $0x38] sm:$0xf]
        %v410 = vld [vmem:[%s304 + $0x3c] sm:$0xf]
        %v411 = vld [vmem:[%s313] sm:$0xf]
        %v412 = vld [vmem:[%s313 + $0x4] sm:$0xf]
        %v413 = vld [vmem:[%s313 + $0x8] sm:$0xf]
        %v414 = vld [vmem:[%s313 + $0xc] sm:$0xf]
        %v415 = vld [vmem:[%s313 + $0x10] sm:$0xf]
        %v416 = vld [vmem:[%s313 + $0x14] sm:$0xf]
        %v417 = vld [vmem:[%s313 + $0x18] sm:$0xf]
        %v418 = vld [vmem:[%s313 + $0x1c] sm:$0xf]
        %v419 = vld [vmem:[%s313 + $0x20] sm:$0xf]
        %v420 = vld [vmem:[%s313 + $0x24] sm:$0xf]
        %v421 = vld [vmem:[%s313 + $0x28] sm:$0xf]
        %v422 = vld [vmem:[%s313 + $0x2c] sm:$0xf]
        %v423 = vld [vmem:[%s313 + $0x30] sm:$0xf]
        %v424 = vld [vmem:[%s313 + $0x34] sm:$0xf]
        %v425 = vld [vmem:[%s313 + $0x38] sm:$0xf]
        %v426 = vld [vmem:[%s313 + $0x3c] sm:$0xf]
        %v443 = vunpack.c.l.b16 %v395
        %v444 = vunpack.c.l.b16 %v396
        %v445 = vunpack.c.l.b16 %v397
        %v446 = vunpack.c.l.b16 %v398
        %v447 = vunpack.c.l.b16 %v399
        %v448 = vunpack.c.l.b16 %v400
        %v449 = vunpack.c.l.b16 %v401
        %v450 = vunpack.c.l.b16 %v402
        %v451 = vunpack.c.l.b16 %v403
        %v452 = vunpack.c.l.b16 %v404
        %v453 = vunpack.c.l.b16 %v405
        %v454 = vunpack.c.l.b16 %v406
        %v455 = vunpack.c.l.b16 %v407
        %v456 = vunpack.c.l.b16 %v408
        %v457 = vunpack.c.l.b16 %v409
        %v458 = vunpack.c.l.b16 %v410
        %v459 = vpack.c.b16 %v444, %v443
        %v460 = vpack.c.b16 %v446, %v445
        %v461 = vpack.c.b16 %v448, %v447
        %v462 = vpack.c.b16 %v450, %v449
        %v463 = vpack.c.b16 %v452, %v451
        %v464 = vpack.c.b16 %v454, %v453
        %v465 = vpack.c.b16 %v456, %v455
        %v466 = vpack.c.b16 %v458, %v457
        %v491 = vunpack.c.l.b16 %v411
        %v492 = vunpack.c.l.b16 %v412
        %v493 = vunpack.c.l.b16 %v413
        %v494 = vunpack.c.l.b16 %v414
        %v495 = vunpack.c.l.b16 %v415
        %v496 = vunpack.c.l.b16 %v416
        %v497 = vunpack.c.l.b16 %v417
        %v498 = vunpack.c.l.b16 %v418
        %v499 = vunpack.c.l.b16 %v419
        %v500 = vunpack.c.l.b16 %v420
        %v501 = vunpack.c.l.b16 %v421
        %v502 = vunpack.c.l.b16 %v422
        %v503 = vunpack.c.l.b16 %v423
        %v504 = vunpack.c.l.b16 %v424
        %v505 = vunpack.c.l.b16 %v425
        %v506 = vunpack.c.l.b16 %v426
        %v507 = vpack.c.b16 %v492, %v491
        %v508 = vpack.c.b16 %v494, %v493
        %v509 = vpack.c.b16 %v496, %v495
        %v510 = vpack.c.b16 %v498, %v497
        %v511 = vpack.c.b16 %v500, %v499
        %v512 = vpack.c.b16 %v502, %v501
        %v513 = vpack.c.b16 %v504, %v503
        %v514 = vpack.c.b16 %v506, %v505
        %523 = vmatprep.subr.bf16.mxu0 0
        %524 = vmatpush1.bf16.msra.mxu0 %v507
        %525 = vmatprep.subr.bf16.mxu0 0
        %526 = vmatpush1.bf16.msra.mxu0 %v508
        %527 = vmatprep.subr.bf16.mxu0 0
        %528 = vmatpush1.bf16.msra.mxu0 %v509
        %529 = vmatprep.subr.bf16.mxu0 0
        %530 = vmatpush1.bf16.msra.mxu0 %v510
        %531 = vmatprep.subr.bf16.mxu0 0
        %532 = vmatpush1.bf16.msra.mxu0 %v511
        %533 = vmatprep.subr.bf16.mxu0 0
        %534 = vmatpush1.bf16.msra.mxu0 %v512
        %535 = vmatprep.subr.bf16.mxu0 0
        %536 = vmatpush1.bf16.msra.mxu0 %v513
        %537 = vmatprep.subr.bf16.mxu0 0
        %538 = vmatpush1.bf16.msra.mxu0 %v514
        %539 = vmatprep.subr.bf16.mxu0 0
        %540 = vmatpush1.bf16.msra.mxu0 0
        %541 = vmatprep.subr.bf16.mxu0 0
        %542 = vmatpush1.bf16.msra.mxu0 0
        %543 = vmatprep.subr.bf16.mxu0 0
        %544 = vmatpush1.bf16.msra.mxu0 0
        %545 = vmatprep.subr.bf16.mxu0 0
        %546 = vmatpush1.bf16.msra.mxu0 0
        %547 = vmatprep.subr.bf16.mxu0 0
        %548 = vmatpush1.bf16.msra.mxu0 0
        %549 = vmatprep.subr.bf16.mxu0 0
        %550 = vmatpush1.bf16.msra.mxu0 0
        %551 = vmatprep.subr.bf16.mxu0 0
        %552 = vmatpush1.bf16.msra.mxu0 0
        %553 = vmatprep.subr.bf16.mxu0 0
        %554 = vmatpush1.bf16.msra.mxu0 0
        %555 = vmatprep.mubr.bf16.mxu0 0
        %556 = vmatmul.mubr.bf16.gmra.mrb[0].mxu0 %v459
        %v557 = vpop.f32.mrb[0].mxu0
        %v558 = vadd.f32 0.0, %v557
        %v559 = vpop.f32.mrb[0].mxu0
        %v560 = vpop.f32.mrb[0].mxu0
        %v561 = vadd.f32 0.0, %v560
        %v562 = vpop.f32.mrb[0].mxu0
        %563 = vmatprep.mubr.bf16.mxu0 0
        %564 = vmatmul.mubr.bf16.gmra.mrb[0].mxu0 %v460
        %v565 = vpop.f32.mrb[0].mxu0
        %v566 = vadd.f32 0.0, %v565
        %v567 = vpop.f32.mrb[0].mxu0
        %v568 = vpop.f32.mrb[0].mxu0
        %v569 = vadd.f32 0.0, %v568
        %v570 = vpop.f32.mrb[0].mxu0
        %571 = vmatprep.mubr.bf16.mxu0 0
        %572 = vmatmul.mubr.bf16.gmra.mrb[0].mxu0 %v461
        %v573 = vpop.f32.mrb[0].mxu0
        %v574 = vadd.f32 0.0, %v573
        %v575 = vpop.f32.mrb[0].mxu0
        %v576 = vpop.f32.mrb[0].mxu0
        %v577 = vadd.f32 0.0, %v576
        %v578 = vpop.f32.mrb[0].mxu0
        %579 = vmatprep.mubr.bf16.mxu0 0
        %580 = vmatmul.mubr.bf16.gmra.mrb[0].mxu0 %v462
        %v581 = vpop.f32.mrb[0].mxu0
        %v582 = vadd.f32 0.0, %v581
        %v583 = vpop.f32.mrb[0].mxu0
        %v584 = vpop.f32.mrb[0].mxu0
        %v585 = vadd.f32 0.0, %v584
        %v586 = vpop.f32.mrb[0].mxu0
        %587 = vmatprep.mubr.bf16.mxu0 0
        %588 = vmatmul.mubr.bf16.gmra.mrb[0].mxu0 %v463
        %v589 = vpop.f32.mrb[0].mxu0
        %v590 = vadd.f32 0.0, %v589
        %v591 = vpop.f32.mrb[0].mxu0
        %v592 = vpop.f32.mrb[0].mxu0
        %v593 = vadd.f32 0.0, %v592
        %v594 = vpop.f32.mrb[0].mxu0
        %595 = vmatprep.mubr.bf16.mxu0 0
        %596 = vmatmul.mubr.bf16.gmra.mrb[0].mxu0 %v464
        %v597 = vpop.f32.mrb[0].mxu0
        %v598 = vadd.f32 0.0, %v597
        %v599 = vpop.f32.mrb[0].mxu0
        %v600 = vpop.f32.mrb[0].mxu0
        %v601 = vadd.f32 0.0, %v600
        %v602 = vpop.f32.mrb[0].mxu0
        %603 = vmatprep.mubr.bf16.mxu0 0
        %604 = vmatmul.mubr.bf16.gmra.mrb[0].mxu0 %v465
        %v605 = vpop.f32.mrb[0].mxu0
        %v606 = vadd.f32 0.0, %v605
        %v607 = vpop.f32.mrb[0].mxu0
        %v608 = vpop.f32.mrb[0].mxu0
        %v609 = vadd.f32 0.0, %v608
        %v610 = vpop.f32.mrb[0].mxu0
        %611 = vmatprep.mubr.bf16.mxu0 0
        %612 = vmatmul.mubr.bf16.gmra.mrb[0].mxu0 %v466
        %v613 = vpop.f32.mrb[0].mxu0
        %v614 = vadd.f32 0.0, %v613
        %v615 = vpop.f32.mrb[0].mxu0
        %v616 = vpop.f32.mrb[0].mxu0
        %v617 = vadd.f32 0.0, %v616
        %v618 = vpop.f32.mrb[0].mxu0
        %619 = vdwg.mxu0
        %v620 = vadd.f32 %v379, %v558
        %v621 = vadd.f32 %v380, %v561
        %v622 = vadd.f32 %v381, %v566
        %v623 = vadd.f32 %v382, %v569
        %v624 = vadd.f32 %v383, %v574
        %v625 = vadd.f32 %v384, %v577
        %v626 = vadd.f32 %v385, %v582
        %v627 = vadd.f32 %v386, %v585
        %v628 = vadd.f32 %v387, %v590
        %v629 = vadd.f32 %v388, %v593
        %v630 = vadd.f32 %v389, %v598
        %v631 = vadd.f32 %v390, %v601
        %v632 = vadd.f32 %v391, %v606
        %v633 = vadd.f32 %v392, %v609
        %v634 = vadd.f32 %v393, %v614
        %v635 = vadd.f32 %v394, %v617
        %636 = vst [vmem:[#allocation2] sm:$0xff] %v620
        %637 = vst [vmem:[#allocation2 + $0x8] sm:$0xff] %v621
        %638 = vst [vmem:[#allocation2 + $0x10] sm:$0xff] %v622
        %639 = vst [vmem:[#allocation2 + $0x18] sm:$0xff] %v623
        %640 = vst [vmem:[#allocation2 + $0x20] sm:$0xff] %v624
        %641 = vst [vmem:[#allocation2 + $0x28] sm:$0xff] %v625
        %642 = vst [vmem:[#allocation2 + $0x30] sm:$0xff] %v626
        %643 = vst [vmem:[#allocation2 + $0x38] sm:$0xff] %v627
        %644 = vst [vmem:[#allocation2 + $0x40] sm:$0xff] %v628
        %645 = vst [vmem:[#allocation2 + $0x48] sm:$0xff] %v629
        %646 = vst [vmem:[#allocation2 + $0x50] sm:$0xff] %v630
        %647 = vst [vmem:[#allocation2 + $0x58] sm:$0xff] %v631
        %648 = vst [vmem:[#allocation2 + $0x60] sm:$0xff] %v632
        %649 = vst [vmem:[#allocation2 + $0x68] sm:$0xff] %v633
        %650 = vst [vmem:[#allocation2 + $0x70] sm:$0xff] %v634
        %651 = vst [vmem:[#allocation2 + $0x78] sm:$0xff] %v635
        %p652 = scmp.eq.s32.totalorder %s32, 1
        // Predicated region
        $region65: #{tpu_custom_call.1} parent=43 // pred_check
          %p653 = pneg %p652
        $region66: #{tpu_custom_call.1} parent=43 // pred_check_branch
          %655 = sbr.rel (%p653) target = $region68
        $region67: #{tpu_custom_call.1} parent=43 // pred_region
          %v656 = vld [vmem:[#allocation2] sm:$0xff]
          %v657 = vld [vmem:[#allocation2 + $0x8] sm:$0xff]
          %v658 = vld [vmem:[#allocation2 + $0x10] sm:$0xff]
          %v659 = vld [vmem:[#allocation2 + $0x18] sm:$0xff]
          %v660 = vld [vmem:[#allocation2 + $0x20] sm:$0xff]
          %v661 = vld [vmem:[#allocation2 + $0x28] sm:$0xff]
          %v662 = vld [vmem:[#allocation2 + $0x30] sm:$0xff]
          %v663 = vld [vmem:[#allocation2 + $0x38] sm:$0xff]
          %v664 = vld [vmem:[#allocation2 + $0x40] sm:$0xff]
          %v665 = vld [vmem:[#allocation2 + $0x48] sm:$0xff]
          %v666 = vld [vmem:[#allocation2 + $0x50] sm:$0xff]
          %v667 = vld [vmem:[#allocation2 + $0x58] sm:$0xff]
          %v668 = vld [vmem:[#allocation2 + $0x60] sm:$0xff]
          %v669 = vld [vmem:[#allocation2 + $0x68] sm:$0xff]
          %v670 = vld [vmem:[#allocation2 + $0x70] sm:$0xff]
          %v671 = vld [vmem:[#allocation2 + $0x78] sm:$0xff]
          %v672 = vpack.c.bf16 %v657, %v656
          %v673 = vpack.c.bf16 %v659, %v658
          %v674 = vpack.c.bf16 %v661, %v660
          %v675 = vpack.c.bf16 %v663, %v662
          %v676 = vpack.c.bf16 %v665, %v664
          %v677 = vpack.c.bf16 %v667, %v666
          %v678 = vpack.c.bf16 %v669, %v668
          %v679 = vpack.c.bf16 %v671, %v670
          %v680 = vld [vmem:[#allocation8] sm:$0xf]
          %v681 = vld [vmem:[#allocation8 + $0x4] sm:$0xf]
          %v682 = vld [vmem:[#allocation8 + $0x8] sm:$0xf]
          %v683 = vld [vmem:[#allocation8 + $0xc] sm:$0xf]
          %v684 = vld [vmem:[#allocation8 + $0x10] sm:$0xf]
          %v685 = vld [vmem:[#allocation8 + $0x14] sm:$0xf]
          %v686 = vld [vmem:[#allocation8 + $0x18] sm:$0xf]
          %v687 = vld [vmem:[#allocation8 + $0x1c] sm:$0xf]
          %v688 = vld [vmem:[#allocation8 + $0x20] sm:$0xf]
          %v689 = vld [vmem:[#allocation8 + $0x24] sm:$0xf]
          %v690 = vld [vmem:[#allocation8 + $0x28] sm:$0xf]
          %v691 = vld [vmem:[#allocation8 + $0x2c] sm:$0xf]
          %v692 = vld [vmem:[#allocation8 + $0x30] sm:$0xf]
          %v693 = vld [vmem:[#allocation8 + $0x34] sm:$0xf]
          %v694 = vld [vmem:[#allocation8 + $0x38] sm:$0xf]
          %v695 = vld [vmem:[#allocation8 + $0x3c] sm:$0xf]
          %v696 = vld [vmem:[%s3] sm:$0x1]
          %v698 = vlaneseq
          %v699 = vshrl.u32 %v698, 7
          %v700 = vsub.s32 0, %v699
          %v701 = vrot.slane %v696, %v700
          %v719 = vunpack.c.l.b16 %v680
          %v720 = vunpack.c.l.b16 %v681
          %v721 = vunpack.c.l.b16 %v682
          %v722 = vunpack.c.l.b16 %v683
          %v723 = vunpack.c.l.b16 %v684
          %v724 = vunpack.c.l.b16 %v685
          %v725 = vunpack.c.l.b16 %v686
          %v726 = vunpack.c.l.b16 %v687
          %v727 = vunpack.c.l.b16 %v688
          %v728 = vunpack.c.l.b16 %v689
          %v729 = vunpack.c.l.b16 %v690
          %v730 = vunpack.c.l.b16 %v691
          %v731 = vunpack.c.l.b16 %v692
          %v732 = vunpack.c.l.b16 %v693
          %v733 = vunpack.c.l.b16 %v694
          %v734 = vunpack.c.l.b16 %v695
          %v735 = vpack.c.b16 %v720, %v719
          %v736 = vpack.c.b16 %v722, %v721
          %v737 = vpack.c.b16 %v724, %v723
          %v738 = vpack.c.b16 %v726, %v725
          %v739 = vpack.c.b16 %v728, %v727
          %v740 = vpack.c.b16 %v730, %v729
          %v741 = vpack.c.b16 %v732, %v731
          %v742 = vpack.c.b16 %v734, %v733
          %751 = vmatprep.subr.bf16.mxu0 0
          %752 = vmatpush1.bf16.msra.mxu0 %v735
          %753 = vmatprep.subr.bf16.mxu0 0
          %754 = vmatpush1.bf16.msra.mxu0 %v736
          %755 = vmatprep.subr.bf16.mxu0 0
          %756 = vmatpush1.bf16.msra.mxu0 %v737
          %757 = vmatprep.subr.bf16.mxu0 0
          %758 = vmatpush1.bf16.msra.mxu0 %v738
          %759 = vmatprep.subr.bf16.mxu0 0
          %760 = vmatpush1.bf16.msra.mxu0 %v739
          %761 = vmatprep.subr.bf16.mxu0 0
          %762 = vmatpush1.bf16.msra.mxu0 %v740
          %763 = vmatprep.subr.bf16.mxu0 0
          %764 = vmatpush1.bf16.msra.mxu0 %v741
          %765 = vmatprep.subr.bf16.mxu0 0
          %766 = vmatpush1.bf16.msra.mxu0 %v742
          %767 = vmatprep.subr.bf16.mxu0 0
          %768 = vmatpush1.bf16.msra.mxu0 0
          %769 = vmatprep.subr.bf16.mxu0 0
          %770 = vmatpush1.bf16.msra.mxu0 0
          %771 = vmatprep.subr.bf16.mxu0 0
          %772 = vmatpush1.bf16.msra.mxu0 0
          %773 = vmatprep.subr.bf16.mxu0 0
          %774 = vmatpush1.bf16.msra.mxu0 0
          %775 = vmatprep.subr.bf16.mxu0 0
          %776 = vmatpush1.bf16.msra.mxu0 0
          %777 = vmatprep.subr.bf16.mxu0 0
          %778 = vmatpush1.bf16.msra.mxu0 0
          %779 = vmatprep.subr.bf16.mxu0 0
          %780 = vmatpush1.bf16.msra.mxu0 0
          %781 = vmatprep.subr.bf16.mxu0 0
          %782 = vmatpush1.bf16.msra.mxu0 0
          %783 = vmatprep.mubr.bf16.mxu0 0
          %784 = vmatmul.mubr.bf16.gmra.mrb[0].mxu0 %v672
          %v785 = vpop.f32.mrb[0].mxu0
          %v786 = vadd.f32 %v701, %v785
          %v787 = vpop.f32.mrb[0].mxu0
          %v788 = vpop.f32.mrb[0].mxu0
          %v789 = vadd.f32 %v701, %v788
          %v790 = vpop.f32.mrb[0].mxu0
          %791 = vmatprep.mubr.bf16.mxu0 0
          %792 = vmatmul.mubr.bf16.gmra.mrb[0].mxu0 %v673
          %v793 = vpop.f32.mrb[0].mxu0
          %v794 = vadd.f32 %v701, %v793
          %v795 = vpop.f32.mrb[0].mxu0
          %v796 = vpop.f32.mrb[0].mxu0
          %v797 = vadd.f32 %v701, %v796
          %v798 = vpop.f32.mrb[0].mxu0
          %799 = vmatprep.mubr.bf16.mxu0 0
          %800 = vmatmul.mubr.bf16.gmra.mrb[0].mxu0 %v674
          %v801 = vpop.f32.mrb[0].mxu0
          %v802 = vadd.f32 %v701, %v801
          %v803 = vpop.f32.mrb[0].mxu0
          %v804 = vpop.f32.mrb[0].mxu0
          %v805 = vadd.f32 %v701, %v804
          %v806 = vpop.f32.mrb[0].mxu0
          %807 = vmatprep.mubr.bf16.mxu0 0
          %808 = vmatmul.mubr.bf16.gmra.mrb[0].mxu0 %v675
          %v809 = vpop.f32.mrb[0].mxu0
          %v810 = vadd.f32 %v701, %v809
          %v811 = vpop.f32.mrb[0].mxu0
          %v812 = vpop.f32.mrb[0].mxu0
          %v813 = vadd.f32 %v701, %v812
          %v814 = vpop.f32.mrb[0].mxu0
          %815 = vmatprep.mubr.bf16.mxu0 0
          %816 = vmatmul.mubr.bf16.gmra.mrb[0].mxu0 %v676
          %v817 = vpop.f32.mrb[0].mxu0
          %v818 = vadd.f32 %v701, %v817
          %v819 = vpop.f32.mrb[0].mxu0
          %v820 = vpop.f32.mrb[0].mxu0
          %v821 = vadd.f32 %v701, %v820
          %v822 = vpop.f32.mrb[0].mxu0
          %823 = vmatprep.mubr.bf16.mxu0 0
          %824 = vmatmul.mubr.bf16.gmra.mrb[0].mxu0 %v677
          %v825 = vpop.f32.mrb[0].mxu0
          %v826 = vadd.f32 %v701, %v825
          %v827 = vpop.f32.mrb[0].mxu0
          %v828 = vpop.f32.mrb[0].mxu0
          %v829 = vadd.f32 %v701, %v828
          %v830 = vpop.f32.mrb[0].mxu0
          %831 = vmatprep.mubr.bf16.mxu0 0
          %832 = vmatmul.mubr.bf16.gmra.mrb[0].mxu0 %v678
          %v833 = vpop.f32.mrb[0].mxu0
          %v834 = vadd.f32 %v701, %v833
          %v835 = vpop.f32.mrb[0].mxu0
          %v836 = vpop.f32.mrb[0].mxu0
          %v837 = vadd.f32 %v701, %v836
          %v838 = vpop.f32.mrb[0].mxu0
          %839 = vmatprep.mubr.bf16.mxu0 0
          %840 = vmatmul.mubr.bf16.gmra.mrb[0].mxu0 %v679
          %v841 = vpop.f32.mrb[0].mxu0
          %v842 = vadd.f32 %v701, %v841
          %v843 = vpop.f32.mrb[0].mxu0
          %v844 = vpop.f32.mrb[0].mxu0
          %v845 = vadd.f32 %v701, %v844
          %v846 = vpop.f32.mrb[0].mxu0
          %847 = vdwg.mxu0
          %v848 = vmax.f32 %v786, 0.0
          %v849 = vmax.f32 %v789, 0.0
          %v850 = vmax.f32 %v794, 0.0
          %v851 = vmax.f32 %v797, 0.0
          %v852 = vmax.f32 %v802, 0.0
          %v853 = vmax.f32 %v805, 0.0
          %v854 = vmax.f32 %v810, 0.0
          %v855 = vmax.f32 %v813, 0.0
          %v856 = vmax.f32 %v818, 0.0
          %v857 = vmax.f32 %v821, 0.0
          %v858 = vmax.f32 %v826, 0.0
          %v859 = vmax.f32 %v829, 0.0
          %v860 = vmax.f32 %v834, 0.0
          %v861 = vmax.f32 %v837, 0.0
          %v862 = vmax.f32 %v842, 0.0
          %v863 = vmax.f32 %v845, 0.0
          %v864 = vpack.c.bf16 %v849, %v848
          %v865 = vpack.c.bf16 %v851, %v850
          %v866 = vpack.c.bf16 %v853, %v852
          %v867 = vpack.c.bf16 %v855, %v854
          %v868 = vpack.c.bf16 %v857, %v856
          %v869 = vpack.c.bf16 %v859, %v858
          %v870 = vpack.c.bf16 %v861, %v860
          %v871 = vpack.c.bf16 %v863, %v862
          %v872 = vld [vmem:[#allocation9] sm:$0xf]
          %v873 = vld [vmem:[#allocation9 + $0x4] sm:$0xf]
          %v874 = vld [vmem:[#allocation9 + $0x8] sm:$0xf]
          %v875 = vld [vmem:[#allocation9 + $0xc] sm:$0xf]
          %v876 = vld [vmem:[#allocation9 + $0x10] sm:$0xf]
          %v877 = vld [vmem:[#allocation9 + $0x14] sm:$0xf]
          %v878 = vld [vmem:[#allocation9 + $0x18] sm:$0xf]
          %v879 = vld [vmem:[#allocation9 + $0x1c] sm:$0xf]
          %v880 = vld [vmem:[#allocation9 + $0x20] sm:$0xf]
          %v881 = vld [vmem:[#allocation9 + $0x24] sm:$0xf]
          %v882 = vld [vmem:[#allocation9 + $0x28] sm:$0xf]
          %v883 = vld [vmem:[#allocation9 + $0x2c] sm:$0xf]
          %v884 = vld [vmem:[#allocation9 + $0x30] sm:$0xf]
          %v885 = vld [vmem:[#allocation9 + $0x34] sm:$0xf]
          %v886 = vld [vmem:[#allocation9 + $0x38] sm:$0xf]
          %v887 = vld [vmem:[#allocation9 + $0x3c] sm:$0xf]
          %v888 = vld [vmem:[%s5] sm:$0x1]
          %v890 = vlaneseq
          %v891 = vshrl.u32 %v890, 7
          %v892 = vsub.s32 0, %v891
          %v893 = vrot.slane %v888, %v892
          %v911 = vunpack.c.l.b16 %v872
          %v912 = vunpack.c.l.b16 %v873
          %v913 = vunpack.c.l.b16 %v874
          %v914 = vunpack.c.l.b16 %v875
          %v915 = vunpack.c.l.b16 %v876
          %v916 = vunpack.c.l.b16 %v877
          %v917 = vunpack.c.l.b16 %v878
          %v918 = vunpack.c.l.b16 %v879
          %v919 = vunpack.c.l.b16 %v880
          %v920 = vunpack.c.l.b16 %v881
          %v921 = vunpack.c.l.b16 %v882
          %v922 = vunpack.c.l.b16 %v883
          %v923 = vunpack.c.l.b16 %v884
          %v924 = vunpack.c.l.b16 %v885
          %v925 = vunpack.c.l.b16 %v886
          %v926 = vunpack.c.l.b16 %v887
          %v927 = vpack.c.b16 %v912, %v911
          %v928 = vpack.c.b16 %v914, %v913
          %v929 = vpack.c.b16 %v916, %v915
          %v930 = vpack.c.b16 %v918, %v917
          %v931 = vpack.c.b16 %v920, %v919
          %v932 = vpack.c.b16 %v922, %v921
          %v933 = vpack.c.b16 %v924, %v923
          %v934 = vpack.c.b16 %v926, %v925
          %943 = vmatprep.subr.bf16.mxu0 0
          %944 = vmatpush1.bf16.msra.mxu0 %v927
          %945 = vmatprep.subr.bf16.mxu0 0
          %946 = vmatpush1.bf16.msra.mxu0 %v928
          %947 = vmatprep.subr.bf16.mxu0 0
          %948 = vmatpush1.bf16.msra.mxu0 %v929
          %949 = vmatprep.subr.bf16.mxu0 0
          %950 = vmatpush1.bf16.msra.mxu0 %v930
          %951 = vmatprep.subr.bf16.mxu0 0
          %952 = vmatpush1.bf16.msra.mxu0 %v931
          %953 = vmatprep.subr.bf16.mxu0 0
          %954 = vmatpush1.bf16.msra.mxu0 %v932
          %955 = vmatprep.subr.bf16.mxu0 0
          %956 = vmatpush1.bf16.msra.mxu0 %v933
          %957 = vmatprep.subr.bf16.mxu0 0
          %958 = vmatpush1.bf16.msra.mxu0 %v934
          %959 = vmatprep.subr.bf16.mxu0 0
          %960 = vmatpush1.bf16.msra.mxu0 0
          %961 = vmatprep.subr.bf16.mxu0 0
          %962 = vmatpush1.bf16.msra.mxu0 0
          %963 = vmatprep.subr.bf16.mxu0 0
          %964 = vmatpush1.bf16.msra.mxu0 0
          %965 = vmatprep.subr.bf16.mxu0 0
          %966 = vmatpush1.bf16.msra.mxu0 0
          %967 = vmatprep.subr.bf16.mxu0 0
          %968 = vmatpush1.bf16.msra.mxu0 0
          %969 = vmatprep.subr.bf16.mxu0 0
          %970 = vmatpush1.bf16.msra.mxu0 0
          %971 = vmatprep.subr.bf16.mxu0 0
          %972 = vmatpush1.bf16.msra.mxu0 0
          %973 = vmatprep.subr.bf16.mxu0 0
          %974 = vmatpush1.bf16.msra.mxu0 0
          %975 = vmatprep.mubr.bf16.mxu0 0
          %976 = vmatmul.mubr.bf16.gmra.mrb[0].mxu0 %v864
          %v977 = vpop.f32.mrb[0].mxu0
          %v978 = vadd.f32 %v893, %v977
          %v979 = vpop.f32.mrb[0].mxu0
          %v980 = vpop.f32.mrb[0].mxu0
          %v981 = vadd.f32 %v893, %v980
          %v982 = vpop.f32.mrb[0].mxu0
          %983 = vmatprep.mubr.bf16.mxu0 0
          %984 = vmatmul.mubr.bf16.gmra.mrb[0].mxu0 %v865
          %v985 = vpop.f32.mrb[0].mxu0
          %v986 = vadd.f32 %v893, %v985
          %v987 = vpop.f32.mrb[0].mxu0
          %v988 = vpop.f32.mrb[0].mxu0
          %v989 = vadd.f32 %v893, %v988
          %v990 = vpop.f32.mrb[0].mxu0
          %991 = vmatprep.mubr.bf16.mxu0 0
          %992 = vmatmul.mubr.bf16.gmra.mrb[0].mxu0 %v866
          %v993 = vpop.f32.mrb[0].mxu0
          %v994 = vadd.f32 %v893, %v993
          %v995 = vpop.f32.mrb[0].mxu0
          %v996 = vpop.f32.mrb[0].mxu0
          %v997 = vadd.f32 %v893, %v996
          %v998 = vpop.f32.mrb[0].mxu0
          %999 = vmatprep.mubr.bf16.mxu0 0
          %1000 = vmatmul.mubr.bf16.gmra.mrb[0].mxu0 %v867
          %v1001 = vpop.f32.mrb[0].mxu0
          %v1002 = vadd.f32 %v893, %v1001
          %v1003 = vpop.f32.mrb[0].mxu0
          %v1004 = vpop.f32.mrb[0].mxu0
          %v1005 = vadd.f32 %v893, %v1004
          %v1006 = vpop.f32.mrb[0].mxu0
          %1007 = vmatprep.mubr.bf16.mxu0 0
          %1008 = vmatmul.mubr.bf16.gmra.mrb[0].mxu0 %v868
          %v1009 = vpop.f32.mrb[0].mxu0
          %v1010 = vadd.f32 %v893, %v1009
          %v1011 = vpop.f32.mrb[0].mxu0
          %v1012 = vpop.f32.mrb[0].mxu0
          %v1013 = vadd.f32 %v893, %v1012
          %v1014 = vpop.f32.mrb[0].mxu0
          %1015 = vmatprep.mubr.bf16.mxu0 0
          %1016 = vmatmul.mubr.bf16.gmra.mrb[0].mxu0 %v869
          %v1017 = vpop.f32.mrb[0].mxu0
          %v1018 = vadd.f32 %v893, %v1017
          %v1019 = vpop.f32.mrb[0].mxu0
          %v1020 = vpop.f32.mrb[0].mxu0
          %v1021 = vadd.f32 %v893, %v1020
          %v1022 = vpop.f32.mrb[0].mxu0
          %1023 = vmatprep.mubr.bf16.mxu0 0
          %1024 = vmatmul.mubr.bf16.gmra.mrb[0].mxu0 %v870
          %v1025 = vpop.f32.mrb[0].mxu0
          %v1026 = vadd.f32 %v893, %v1025
          %v1027 = vpop.f32.mrb[0].mxu0
          %v1028 = vpop.f32.mrb[0].mxu0
          %v1029 = vadd.f32 %v893, %v1028
          %v1030 = vpop.f32.mrb[0].mxu0
          %1031 = vmatprep.mubr.bf16.mxu0 0
          %1032 = vmatmul.mubr.bf16.gmra.mrb[0].mxu0 %v871
          %v1033 = vpop.f32.mrb[0].mxu0
          %v1034 = vadd.f32 %v893, %v1033
          %v1035 = vpop.f32.mrb[0].mxu0
          %v1036 = vpop.f32.mrb[0].mxu0
          %v1037 = vadd.f32 %v893, %v1036
          %v1038 = vpop.f32.mrb[0].mxu0
          %1039 = vdwg.mxu0
          %v1040 = vmax.f32 %v978, 0.0
          %v1041 = vmax.f32 %v981, 0.0
          %v1042 = vmax.f32 %v986, 0.0
          %v1043 = vmax.f32 %v989, 0.0
          %v1044 = vmax.f32 %v994, 0.0
          %v1045 = vmax.f32 %v997, 0.0
          %v1046 = vmax.f32 %v1002, 0.0
          %v1047 = vmax.f32 %v1005, 0.0
          %v1048 = vmax.f32 %v1010, 0.0
          %v1049 = vmax.f32 %v1013, 0.0
          %v1050 = vmax.f32 %v1018, 0.0
          %v1051 = vmax.f32 %v1021, 0.0
          %v1052 = vmax.f32 %v1026, 0.0
          %v1053 = vmax.f32 %v1029, 0.0
          %v1054 = vmax.f32 %v1034, 0.0
          %v1055 = vmax.f32 %v1037, 0.0
          %v1056 = vpack.c.bf16 %v1041, %v1040
          %v1057 = vpack.c.bf16 %v1043, %v1042
          %v1058 = vpack.c.bf16 %v1045, %v1044
          %v1059 = vpack.c.bf16 %v1047, %v1046
          %v1060 = vpack.c.bf16 %v1049, %v1048
          %v1061 = vpack.c.bf16 %v1051, %v1050
          %v1062 = vpack.c.bf16 %v1053, %v1052
          %v1063 = vpack.c.bf16 %v1055, %v1054
          %v1072 = vunpack.c.l.b16 %v1056
          %v1073 = vunpack.c.h.b16 %v1056
          %v1074 = vunpack.c.l.b16 %v1057
          %v1075 = vunpack.c.h.b16 %v1057
          %v1076 = vunpack.c.l.b16 %v1058
          %v1077 = vunpack.c.h.b16 %v1058
          %v1078 = vunpack.c.l.b16 %v1059
          %v1079 = vunpack.c.h.b16 %v1059
          %v1080 = vunpack.c.l.b16 %v1060
          %v1081 = vunpack.c.h.b16 %v1060
          %v1082 = vunpack.c.l.b16 %v1061
          %v1083 = vunpack.c.h.b16 %v1061
          %v1084 = vunpack.c.l.b16 %v1062
          %v1085 = vunpack.c.h.b16 %v1062
          %v1086 = vunpack.c.l.b16 %v1063
          %v1087 = vunpack.c.h.b16 %v1063
          %v1088 = vpack.c.b16 %v1072, %v1072
          %v1089 = vpack.c.b16 %v1073, %v1073
          %v1090 = vpack.c.b16 %v1074, %v1074
          %v1091 = vpack.c.b16 %v1075, %v1075
          %v1092 = vpack.c.b16 %v1076, %v1076
          %v1093 = vpack.c.b16 %v1077, %v1077
          %v1094 = vpack.c.b16 %v1078, %v1078
          %v1095 = vpack.c.b16 %v1079, %v1079
          %v1096 = vpack.c.b16 %v1080, %v1080
          %v1097 = vpack.c.b16 %v1081, %v1081
          %v1098 = vpack.c.b16 %v1082, %v1082
          %v1099 = vpack.c.b16 %v1083, %v1083
          %v1100 = vpack.c.b16 %v1084, %v1084
          %v1101 = vpack.c.b16 %v1085, %v1085
          %v1102 = vpack.c.b16 %v1086, %v1086
          %v1103 = vpack.c.b16 %v1087, %v1087
          %1120 = vst [vmem:[%s354] sm:$0xf] %v1088
          %1121 = vst [vmem:[%s354 + $0x4] sm:$0xf] %v1089
          %1122 = vst [vmem:[%s354 + $0x8] sm:$0xf] %v1090
          %1123 = vst [vmem:[%s354 + $0xc] sm:$0xf] %v1091
          %1124 = vst [vmem:[%s354 + $0x10] sm:$0xf] %v1092
          %1125 = vst [vmem:[%s354 + $0x14] sm:$0xf] %v1093
          %1126 = vst [vmem:[%s354 + $0x18] sm:$0xf] %v1094
          %1127 = vst [vmem:[%s354 + $0x1c] sm:$0xf] %v1095
          %1128 = vst [vmem:[%s354 + $0x20] sm:$0xf] %v1096
          %1129 = vst [vmem:[%s354 + $0x24] sm:$0xf] %v1097
          %1130 = vst [vmem:[%s354 + $0x28] sm:$0xf] %v1098
          %1131 = vst [vmem:[%s354 + $0x2c] sm:$0xf] %v1099
          %1132 = vst [vmem:[%s354 + $0x30] sm:$0xf] %v1100
          %1133 = vst [vmem:[%s354 + $0x34] sm:$0xf] %v1101
          %1134 = vst [vmem:[%s354 + $0x38] sm:$0xf] %v1102
          %1135 = vst [vmem:[%s354 + $0x3c] sm:$0xf] %v1103
        $region68: #{tpu_custom_call.1} parent=43 // pred_fallthru
          _
        %s1136 = sand.u32 %s185, 1
        %s1137 = scalar_lea.sflag [#allocation5], %s1136
        %s1138 = sand.u32 %s185, 1
        %s1139 = smul.addr %s1138, 64
        %s1140 = scalar_lea.vmem [#allocation11], %s1139
        // Predicated region
        $region69: #{tpu_custom_call.1} parent=43 // pred_check
          %p1141 = pneg %p195
        $region70: #{tpu_custom_call.1} parent=43 // pred_check_branch
          %1143 = sbr.rel (%p1141) target = $region72
        $region71: #{tpu_custom_call.1} parent=43 // pred_region
          %s1144 = smul.u32 16, %s31
          %s1146 = ssub.s32 1024, 1024
          %1147 = vsyncadd %s1137, %s1146
          %s1148 = smul.addr %s1144, 64
          %s1149 = scalar_lea.hbm %s6, %s1148
          %s1150 = sshll.u32 %s1140, 4
          %s1151 = int_to_ptr.vmem [resolvable:$true] %s1150
          %1156 = dma.vmem_to_hbm [thread:$0]  %s1151, 1024, %s1149, %s1137, 64, 64, 4
        $region72: #{tpu_custom_call.1} parent=43 // pred_fallthru
          _
      $region44: #{tpu_custom_call.1} parent=5 // pred_fallthru
        _
      %p1157 = scmp.le.s32.totalorder 2, %s22
      // Predicated region
      $region73: #{tpu_custom_call.1} parent=5 // pred_check
        %p1158 = pneg %p1157
      $region74: #{tpu_custom_call.1} parent=5 // pred_check_branch
        %1160 = sbr.rel (%p1158) target = $region76
      $region75: #{tpu_custom_call.1} parent=5 // pred_region
        %s1161 = ssub.s32 %s22, 2
        // Predicated region
        $region77: #{tpu_custom_call.1} parent=75 // pred_check
          %p1162 = pneg %p201
        $region78: #{tpu_custom_call.1} parent=75 // pred_check_branch
          %1164 = sbr.rel (%p1162) target = $region80
        $region79: #{tpu_custom_call.1} parent=75 // pred_region
          %s1165 = sand.u32 %s186, 1
          %s1166 = scalar_lea.sflag [#allocation5], %s1165
          %s1167 = sand.u32 %s186, 1
          %s1168 = smul.addr %s1167, 64
          %s1169 = scalar_lea.vmem [#allocation11], %s1168
          %1170 = dma.done %s1166, 1024
        $region80: #{tpu_custom_call.1} parent=75 // pred_fallthru
          _
      $region76: #{tpu_custom_call.1} parent=5 // pred_fallthru
        _
    $region6: #{tpu_custom_call.1} parent=1 // loop_footer
      %s26 = sadd.s32 1, %s22
    $region7: #{tpu_custom_call.1} parent=1 // loop_footer_branch
      %21 = sbr.rel target = $region3
    $region8: #{tpu_custom_call.1} parent=1 // loop_exit
      _
    %1171 = vsyncpa [#allocation4], 1
    %s1172 = scalar_lea.sflag [#allocation4], 1
    %1173 = vsyncpa %s1172, 1
    %1174 = vsyncpa [#allocation7], 1
    %s1175 = scalar_lea.sflag [#allocation7], 1
    %1176 = vsyncpa %s1175, 1
    %1177 = vsyncpa [#allocation10], 1
    %1178 = vsyncpa [#allocation5], 1
    %s1179 = scalar_lea.sflag [#allocation5], 1
    %1180 = vsyncpa %s1179, 1

</llo_original>
